<compile_context>
chip_gen: v6e
topology: v6e:2x2x1
jax: 0.10.0
libtpu: 0.0.40
codegen_flags: <defaults>
</compile_context>

<pallas_src>
import functools

import jax
import jax.numpy as jnp
from jax.experimental import pallas as pl
from jax.experimental.pallas import tpu as pltpu


# ----------------------------- elementwise loss -----------------------------
def _elem_loss(diff, loss_type):
    if loss_type == "l1":
        return jnp.abs(diff)
    elif loss_type == "smoothl1":
        beta = 0.5
        a = jnp.abs(diff)
        quad = diff * diff * (0.5 / beta)          # constant mul, no divide
        return jnp.where(a < beta, quad, a - 0.5 * beta)
    else:
        raise NotImplementedError(loss_type)


# ------------------------------- Pallas kernel -------------------------------
def _fused_vote_line_kernel(sc_ref,       # (bs, 12) SMEM scalar prefetch
                            pcv_ref,      # (1, 6, tile_rows, 128) VMEM
                            out_ref,      # (1, 2, 8, 128) VMEM
                            acc_ref,      # (2, 8, 128) f32 VMEM scratch
                            *, loss_type, tile_rows, n_valid,
                            rows_last_offset, has_pad):
    b = pl.program_id(0)
    s = pl.program_id(1)
    t = pl.program_id(2)

    @pl.when(t == 0)
    def _init():
        acc_ref[...] = jnp.zeros_like(acc_ref)

    # Sublane/lane dense component planes, (tile_rows, 128) each.
    pcx = pcv_ref[0, 0].astype(jnp.float32)
    pcy = pcv_ref[0, 1].astype(jnp.float32)
    pcz = pcv_ref[0, 2].astype(jnp.float32)
    vtx = pcv_ref[0, 3].astype(jnp.float32)
    vty = pcv_ref[0, 4].astype(jnp.float32)
    vtz = pcv_ref[0, 5].astype(jnp.float32)

    # Packed per-batch 3-vectors: [R[:,2] | gt_t | g | p_t]
    r2x, r2y, r2z = sc_ref[b, 0], sc_ref[b, 1], sc_ref[b, 2]
    tx, ty, tz = sc_ref[b, 3], sc_ref[b, 4], sc_ref[b, 5]
    gx, gy, gz = sc_ref[b, 6], sc_ref[b, 7], sc_ref[b, 8]
    px, py, pz = sc_ref[b, 9], sc_ref[b, 10], sc_ref[b, 11]

    # ---- Vote_line: gt_vote = R[:,2] * (R[:,2] . (pc - t)) + t - pc
    dx, dy, dz = pcx - tx, pcy - ty, pcz - tz
    z = r2x * dx + r2y * dy + r2z * dz
    line = (_elem_loss(vtx - (r2x * z - dx), loss_type)
            + _elem_loss(vty - (r2y * z - dy), loss_type)
            + _elem_loss(vtz - (r2z * z - dz), loss_type))

    # ---- Vote_line_con: a = g * (g . (pc - pt)) - (pc - pt); loss(a - vote)
    rx, ry, rz = pcx - px, pcy - py, pcz - pz
    proj = gx * rx + gy * ry + gz * rz
    con = (_elem_loss(gx * proj - rx - vtx, loss_type)
           + _elem_loss(gy * proj - ry - vty, loss_type)
           + _elem_loss(gz * proj - rz - vtz, loss_type))

    def _accum(lv, cv):
        # (tile_rows,128) -> (tile_rows//8, 8, 128): sublane-tile preserving reshape;
        # the reduction over axis 0 is a chain of vreg elementwise adds (pure VPU).
        acc_ref[0] += jnp.sum(lv.reshape(tile_rows // 8, 8, 128), axis=0)
        acc_ref[1] += jnp.sum(cv.reshape(tile_rows // 8, 8, 128), axis=0)

    if has_pad:   # static: only emitted when n_pts is not a multiple of the padding
        is_ragged = jnp.logical_and(s == pl.num_programs(1) - 1,
                                    t == pl.num_programs(2) - 1)

        @pl.when(is_ragged)
        def _masked():
            row = jax.lax.broadcasted_iota(jnp.int32, (tile_rows, 128), 0)
            lane = jax.lax.broadcasted_iota(jnp.int32, (tile_rows, 128), 1)
            idx = (row + rows_last_offset) * 128 + lane
            valid = (idx < n_valid).astype(jnp.float32)
            _accum(line * valid, con * valid)

        @pl.when(jnp.logical_not(is_ragged))
        def _full():
            _accum(line, con)
    else:
        _accum(line, con)

    @pl.when(t == pl.num_programs(2) - 1)
    def _finalize():
        out_ref[0] = acc_ref[...]


# --------------------------------- wrappers ----------------------------------
def _cdiv(a, b):
    return (a + b - 1) // b


def _round_up(a, b):
    return _cdiv(a, b) * b


@functools.partial(jax.jit, static_argnames=("loss_type", "max_tile_n", "n_split"))
def vote_line_losses(PC, PC_vote, gt_R, gt_t, p_g_vec, p_t, *,
                     loss_type="smoothl1", max_tile_n=32768, n_split=None):
    """Returns (vote_line_loss, vote_line_con_loss), both unweighted means.

    Note: assumes every batch element shares the same valid n_pts (true for a dense
    (bs, n_pts, 3) tensor), so sum / (bs * n_pts * 3) equals the per-batch mean avg.
    """
    bs, n_pts, _ = PC.shape

    n_rows = _cdiv(n_pts, 128)
    max_rows = max(8, (int(max_tile_n) // 128 // 8) * 8)
    if n_split is None:
        # give the second v7x TensorCore work when the batch axis alone can't
        n_split = 2 if (bs % 2 == 1 and n_rows >= 16) else 1
    n_split = max(1, int(n_split))

    n_tiles_total = _round_up(max(1, _cdiv(n_rows, max_rows)), n_split)
    tile_rows = _round_up(_cdiv(n_rows, n_tiles_total), 8)
    n_rows_pad = tile_rows * n_tiles_total
    n_tiles_ps = n_tiles_total // n_split
    n_pad = n_rows_pad * 128
    has_pad = n_pad != n_pts
    rows_last_offset = n_rows_pad - tile_rows

    # Keep bf16 activations in bf16 in HBM (halves DMA bytes); upcast in kernel.
    stor_dtype = (jnp.bfloat16
                  if (PC.dtype == jnp.bfloat16 and PC_vote.dtype == jnp.bfloat16)
                  else jnp.float32)

    # Single packed [pc; vote] slab, transposed/cast/padded in one XLA copy pass,
    # then a free metadata reshape to the sublane/lane-dense (bs,6,rows,128) layout.
    # TODO(synk): if upstream keeps Points/Vote channel-first (bs,3,n), this extra
    # HBM copy pass disappears entirely.
    pcv = jnp.concatenate(
        [jnp.swapaxes(PC, 1, 2), jnp.swapaxes(PC_vote, 1, 2)], axis=1
    ).astype(stor_dtype)                                          # (bs, 6, n_pts)
    if has_pad:
        pcv = jnp.pad(pcv, ((0, 0), (0, 0), (0, n_pad - n_pts)))
    pcv = pcv.reshape(bs, 6, n_rows_pad, 128)

    # One packed scalar-prefetch array instead of four (4x less SMEM padding/DMAs).
    sc = jnp.concatenate(
        [gt_R[:, :, 2].reshape(bs, 3), gt_t.reshape(bs, 3),
         p_g_vec.reshape(bs, 3), p_t.reshape(bs, 3)], axis=1
    ).astype(jnp.float32)                                         # (bs, 12)

    kernel = functools.partial(
        _fused_vote_line_kernel, loss_type=loss_type, tile_rows=tile_rows,
        n_valid=n_pts, rows_last_offset=rows_last_offset, has_pad=has_pad)

    grid_spec = pltpu.PrefetchScalarGridSpec(
        num_scalar_prefetch=1,
        grid=(bs, n_split, n_tiles_ps),
        in_specs=[pl.BlockSpec(
            (1, 6, tile_rows, 128),
            lambda b, s, t, sc_ref: (b, 0, s * n_tiles_ps + t, 0))],
        out_specs=pl.BlockSpec(
            (1, 2, 8, 128),
            lambda b, s, t, sc_ref: (b * n_split + s, 0, 0, 0)),
        scratch_shapes=[pltpu.VMEM((2, 8, 128), jnp.float32)],
    )

    tile_bytes = 6 * tile_rows * 128 * jnp.dtype(stor_dtype).itemsize
    # 48 MiB cap keeps headroom on v7x's 64 MiB VMEM; plenty on v5e/v6e.
    vmem_limit = int(min(48 * 1024 * 1024, max(16 * 1024 * 1024, 4 * tile_bytes)))

    partials = pl.pallas_call(
        kernel,
        out_shape=jax.ShapeDtypeStruct((bs * n_split, 2, 8, 128), jnp.float32),
        grid_spec=grid_spec,
        compiler_params=pltpu.CompilerParams(
            dimension_semantics=("parallel", "parallel", "arbitrary"),
            vmem_limit_bytes=vmem_limit),
    )(sc, pcv)

    # sum_i mean_i(...) / bs == global sum / (bs * n_pts * 3)  (equal n_pts per batch)
    denom = float(bs * n_pts * 3)
    line = jnp.sum(partials[:, 0]) / denom
    con = jnp.sum(partials[:, 1]) / denom
    return line, con


def vote_line_loss(PC, PC_vote, gt_R, gt_t, loss_type, max_tile_n=32768):
    bs = PC.shape[0]
    zeros3 = jnp.zeros((bs, 3), jnp.float32)
    line, _ = vote_line_losses(PC, PC_vote, gt_R, gt_t, zeros3, zeros3,
                               loss_type=loss_type, max_tile_n=max_tile_n)
    return line


def vote_line_con_loss(PC, PC_vote, p_g_vec, p_t, loss_type, max_tile_n=32768):
    bs = PC.shape[0]
    zeros3 = jnp.zeros((bs, 3), jnp.float32)
    eye3 = jnp.broadcast_to(jnp.eye(3, dtype=jnp.float32), (bs, 3, 3))
    _, con = vote_line_losses(PC, PC_vote, eye3, zeros3, p_g_vec, p_t,
                              loss_type=loss_type, max_tile_n=max_tile_n)
    return con


class VoteLineCfg:
    def __init__(self, pose_loss_type="smoothl1", vote_line_w=2.0,
                 vote_line_con_w=1.0, vote_tile_n=32768):
        self.pose_loss_type = pose_loss_type
        self.vote_line_w = vote_line_w
        self.vote_line_con_w = vote_line_con_w
        self.vote_tile_n = vote_tile_n


def vote_line_loss_forward(cfg, namelist, pred_list, gt_list):
    """Mirrors Vote_line_loss.forward (both losses computed in one fused kernel)."""
    need_line = "Vote_line" in namelist
    need_con = "Vote_line_con" in namelist and cfg.vote_line_con_w > 0
    loss_list = {"Vote_line": 0.0, "Vote_line_con": 0.0}
    if not (need_line or need_con):
        return loss_list

    PC = gt_list["Points"]
    Vote = pred_list["Vote"]
    bs = PC.shape[0]
    zeros3 = jnp.zeros((bs, 3), jnp.float32)
    eye3 = jnp.broadcast_to(jnp.eye(3, dtype=jnp.float32), (bs, 3, 3))
    gt_R = gt_list["R"] if need_line else eye3
    gt_t = gt_list["T"] if need_line else zeros3
    p_g = pred_list["Rot1"] if need_con else zeros3
    p_t = pred_list["Tran"] if need_con else zeros3

    line, con = vote_line_losses(PC, Vote, gt_R, gt_t, p_g, p_t,
                                 loss_type=cfg.pose_loss_type,
                                 max_tile_n=cfg.vote_tile_n)
    if need_line:
        loss_list["Vote_line"] = cfg.vote_line_w * line
    if need_con:
        loss_list["Vote_line_con"] = cfg.vote_line_con_w * con
    return loss_list


# ------------------------- pure-JAX reference (check) -------------------------
def _ref_elem_mean(a, b, loss_type):
    return jnp.mean(_elem_loss(a - b, loss_type))


def _ref_vote_line(PC, PC_vote, gt_R, gt_t, loss_type):
    bs, n_pts, _ = PC.shape
    total = 0.0
    for i in range(bs):
        cano = (gt_R[i].T @ (PC[i] - gt_t[i][None, :]).T).T
        plc = jnp.zeros((n_pts, 3), jnp.float32).at[:, 2].set(cano[:, 2])
        pline = (gt_R[i] @ plc.T + gt_t[i][:, None]).T
        total += _ref_elem_mean(PC_vote[i], pline - PC[i], loss_type)
    return total / bs


def _ref_vote_line_con(PC, PC_vote, p_g, p_t, loss_type):
    bs = PC.shape[0]
    total = 0.0
    for i in range(bs):
        r = PC[i] - p_t[i][None, :]
        vec_along = (r @ p_g[i].reshape(-1, 1)) @ p_g[i].reshape(1, -1)
        total += _ref_elem_mean(vec_along - r, PC_vote[i], loss_type)
    return total / bs


# ------------------------------------ main ------------------------------------
if __name__ == "__main__":
    key = jax.random.PRNGKey(0)

    # ---- Test A: bs=2, ragged n_pts, both loss types through the forward() API ----
    bs, n_pts = 2, 1000        # non-multiple of 128 -> exercises padding + lane mask
    ks = jax.random.split(key, 6)
    PC = jax.random.normal(ks[0], (bs, n_pts, 3), jnp.float32)
    Vote = 0.1 * jax.random.normal(ks[1], (bs, n_pts, 3), jnp.float32)
    Q, _ = jnp.linalg.qr(jax.random.normal(ks[2], (bs, 3, 3), jnp.float32))
    R = Q.astype(jnp.float32)
    T = 0.1 * jax.random.normal(ks[3], (bs, 3), jnp.float32)
    Rot1 = jax.random.normal(ks[4], (bs, 3), jnp.float32)
    Rot1 = Rot1 / jnp.linalg.norm(Rot1, axis=-1, keepdims=True)
    Tran = 0.1 * jax.random.normal(ks[5], (bs, 3), jnp.float32)

    cfg = VoteLineCfg(pose_loss_type="smoothl1", vote_line_w=2.0,
                      vote_line_con_w=1.0, vote_tile_n=256)
    namelist = ["Vote_line", "Vote_line_con"]
    pred_list = {"Vote": Vote, "Rot1": Rot1, "Tran": Tran}
    gt_list = {"Points": PC, "R": R, "T": T}

    losses = vote_line_loss_forward(cfg, namelist, pred_list, gt_list)
    losses = {k: jax.block_until_ready(v) for k, v in losses.items()}

    ref_line = cfg.vote_line_w * _ref_vote_line(PC, Vote, R, T, cfg.pose_loss_type)
    ref_con = cfg.vote_line_con_w * _ref_vote_line_con(PC, Vote, Rot1, Tran,
                                                       cfg.pose_loss_type)
    assert jnp.allclose(losses["Vote_line"], ref_line, rtol=2e-4, atol=1e-5), \
        (losses["Vote_line"], ref_line)
    assert jnp.allclose(losses["Vote_line_con"], ref_con, rtol=2e-4, atol=1e-5), \
        (losses["Vote_line_con"], ref_con)

    cfg_l1 = VoteLineCfg(pose_loss_type="l1", vote_line_w=1.0,
                         vote_line_con_w=1.0, vote_tile_n=256)
    losses_l1 = vote_line_loss_forward(cfg_l1, namelist, pred_list, gt_list)
    losses_l1 = {k: jax.block_until_ready(v) for k, v in losses_l1.items()}
    assert jnp.allclose(losses_l1["Vote_line"],
                        _ref_vote_line(PC, Vote, R, T, "l1"), rtol=2e-4, atol=1e-5)
    assert jnp.allclose(losses_l1["Vote_line_con"],
                        _ref_vote_line_con(PC, Vote, Rot1, Tran, "l1"),
                        rtol=2e-4, atol=1e-5)

    # ---- Test B: bs=1 (odd) -> core-split path, multi-tile accumulation, ragged ----
    bs2, n_pts2 = 1, 4000
    ks2 = jax.random.split(jax.random.PRNGKey(1), 6)
    PC2 = jax.random.normal(ks2[0], (bs2, n_pts2, 3), jnp.float32)
    Vote2 = 0.1 * jax.random.normal(ks2[1], (bs2, n_pts2, 3), jnp.float32)
    Q2, _ = jnp.linalg.qr(jax.random.normal(ks2[2], (bs2, 3, 3), jnp.float32))
    R2 = Q2.astype(jnp.float32)
    T2 = 0.1 * jax.random.normal(ks2[3], (bs2, 3), jnp.float32)
    Rot2 = jax.random.normal(ks2[4], (bs2, 3), jnp.float32)
    Rot2 = Rot2 / jnp.linalg.norm(Rot2, axis=-1, keepdims=True)
    Tran2 = 0.1 * jax.random.normal(ks2[5], (bs2, 3), jnp.float32)

    line2, con2 = vote_line_losses(PC2, Vote2, R2, T2, Rot2, Tran2,
                                   loss_type="smoothl1", max_tile_n=1024)
    line2, con2 = jax.block_until_ready(line2), jax.block_until_ready(con2)
    assert jnp.allclose(line2, _ref_vote_line(PC2, Vote2, R2, T2, "smoothl1"),
                        rtol=2e-4, atol=1e-5)
    assert jnp.allclose(con2, _ref_vote_line_con(PC2, Vote2, Rot2, Tran2, "smoothl1"),
                        rtol=2e-4, atol=1e-5)

    print("KERNEL_OK")
</pallas_src>

<mosaic_0001>
module attributes {stable_mosaic.version = 11 : i64} {
  func.func @_fused_vote_line_kernel(%arg0: i32, %arg1: i32, %arg2: i32, %arg3: memref<2x12xf32, #tpu.memory_space<smem>>, %arg4: memref<1x6x8x128xf32, #tpu.memory_space<vmem>>, %arg5: memref<1x2x8x128xf32, #tpu.memory_space<vmem>>, %arg6: memref<2x8x128xf32, #tpu.memory_space<vmem>>) attributes {dimension_semantics = [#tpu.dimension_semantics<parallel>, #tpu.dimension_semantics<parallel>, #tpu.dimension_semantics<arbitrary>], iteration_bounds = array<i64: 2, 1, 1>, scalar_prefetch = 1 : i64, scratch_operands = 1 : i64, tpu.core_type = #tpu.core_type<tc>, window_params = [{transform_indices = @transform_0, window_bounds = array<i64: 1, 6, 8, 128>}, {transform_indices = @transform_1, window_bounds = array<i64: 1, 2, 8, 128>}]} {
    %c0_i32 = arith.constant 0 : i32
    %0 = arith.cmpi eq, %arg2, %c0_i32 : i32
    %1 = arith.extui %0 : i1 to i32
    %c0_i32_0 = arith.constant 0 : i32
    %2 = arith.cmpi ne, %1, %c0_i32_0 : i32
    scf.if %2 {
      %cst_48 = arith.constant 0.000000e+00 : f32
      %160 = vector.broadcast %cst_48 : f32 to vector<2x8x128xf32>
      %c0_49 = arith.constant 0 : index
      %c0_50 = arith.constant 0 : index
      %c0_51 = arith.constant 0 : index
      %161 = vector.load %arg6[%c0_49, %c0_50, %c0_51] : memref<2x8x128xf32, #tpu.memory_space<vmem>>, vector<2x8x128xf32>
      tpu.vector_store %arg6[%c0_49, %c0_50, %c0_51], %160 {strides = array<i32>} : memref<2x8x128xf32, #tpu.memory_space<vmem>>, vector<2x8x128xf32>,
    } else {
    }
    %c0 = arith.constant 0 : index
    %c0_1 = arith.constant 0 : index
    %c0_2 = arith.constant 0 : index
    %c0_3 = arith.constant 0 : index
    %3 = vector.load %arg4[%c0, %c0_1, %c0_2, %c0_3] : memref<1x6x8x128xf32, #tpu.memory_space<vmem>>, vector<1x1x8x128xf32>
    %4 = vector.shape_cast %3 : vector<1x1x8x128xf32> to vector<8x128xf32>
    %c0_4 = arith.constant 0 : index
    %c1 = arith.constant 1 : index
    %c0_5 = arith.constant 0 : index
    %c0_6 = arith.constant 0 : index
    %5 = vector.load %arg4[%c0_4, %c1, %c0_5, %c0_6] : memref<1x6x8x128xf32, #tpu.memory_space<vmem>>, vector<1x1x8x128xf32>
    %6 = vector.shape_cast %5 : vector<1x1x8x128xf32> to vector<8x128xf32>
    %c0_7 = arith.constant 0 : index
    %c2 = arith.constant 2 : index
    %c0_8 = arith.constant 0 : index
    %c0_9 = arith.constant 0 : index
    %7 = vector.load %arg4[%c0_7, %c2, %c0_8, %c0_9] : memref<1x6x8x128xf32, #tpu.memory_space<vmem>>, vector<1x1x8x128xf32>
    %8 = vector.shape_cast %7 : vector<1x1x8x128xf32> to vector<8x128xf32>
    %c0_10 = arith.constant 0 : index
    %c3 = arith.constant 3 : index
    %c0_11 = arith.constant 0 : index
    %c0_12 = arith.constant 0 : index
    %9 = vector.load %arg4[%c0_10, %c3, %c0_11, %c0_12] : memref<1x6x8x128xf32, #tpu.memory_space<vmem>>, vector<1x1x8x128xf32>
    %10 = vector.shape_cast %9 : vector<1x1x8x128xf32> to vector<8x128xf32>
    %c0_13 = arith.constant 0 : index
    %c4 = arith.constant 4 : index
    %c0_14 = arith.constant 0 : index
    %c0_15 = arith.constant 0 : index
    %11 = vector.load %arg4[%c0_13, %c4, %c0_14, %c0_15] : memref<1x6x8x128xf32, #tpu.memory_space<vmem>>, vector<1x1x8x128xf32>
    %12 = vector.shape_cast %11 : vector<1x1x8x128xf32> to vector<8x128xf32>
    %c0_16 = arith.constant 0 : index
    %c5 = arith.constant 5 : index
    %c0_17 = arith.constant 0 : index
    %c0_18 = arith.constant 0 : index
    %13 = vector.load %arg4[%c0_16, %c5, %c0_17, %c0_18] : memref<1x6x8x128xf32, #tpu.memory_space<vmem>>, vector<1x1x8x128xf32>
    %14 = vector.shape_cast %13 : vector<1x1x8x128xf32> to vector<8x128xf32>
    %15 = arith.index_cast %arg0 : i32 to index
    %c0_19 = arith.constant 0 : index
    %16 = memref.load %arg3[%15, %c0_19] : memref<2x12xf32, #tpu.memory_space<smem>>
    %17 = arith.index_cast %arg0 : i32 to index
    %c1_20 = arith.constant 1 : index
    %18 = memref.load %arg3[%17, %c1_20] : memref<2x12xf32, #tpu.memory_space<smem>>
    %19 = arith.index_cast %arg0 : i32 to index
    %c2_21 = arith.constant 2 : index
    %20 = memref.load %arg3[%19, %c2_21] : memref<2x12xf32, #tpu.memory_space<smem>>
    %21 = arith.index_cast %arg0 : i32 to index
    %c3_22 = arith.constant 3 : index
    %22 = memref.load %arg3[%21, %c3_22] : memref<2x12xf32, #tpu.memory_space<smem>>
    %23 = arith.index_cast %arg0 : i32 to index
    %c4_23 = arith.constant 4 : index
    %24 = memref.load %arg3[%23, %c4_23] : memref<2x12xf32, #tpu.memory_space<smem>>
    %25 = arith.index_cast %arg0 : i32 to index
    %c5_24 = arith.constant 5 : index
    %26 = memref.load %arg3[%25, %c5_24] : memref<2x12xf32, #tpu.memory_space<smem>>
    %27 = arith.index_cast %arg0 : i32 to index
    %c6 = arith.constant 6 : index
    %28 = memref.load %arg3[%27, %c6] : memref<2x12xf32, #tpu.memory_space<smem>>
    %29 = arith.index_cast %arg0 : i32 to index
    %c7 = arith.constant 7 : index
    %30 = memref.load %arg3[%29, %c7] : memref<2x12xf32, #tpu.memory_space<smem>>
    %31 = arith.index_cast %arg0 : i32 to index
    %c8 = arith.constant 8 : index
    %32 = memref.load %arg3[%31, %c8] : memref<2x12xf32, #tpu.memory_space<smem>>
    %33 = arith.index_cast %arg0 : i32 to index
    %c9 = arith.constant 9 : index
    %34 = memref.load %arg3[%33, %c9] : memref<2x12xf32, #tpu.memory_space<smem>>
    %35 = arith.index_cast %arg0 : i32 to index
    %c10 = arith.constant 10 : index
    %36 = memref.load %arg3[%35, %c10] : memref<2x12xf32, #tpu.memory_space<smem>>
    %37 = arith.index_cast %arg0 : i32 to index
    %c11 = arith.constant 11 : index
    %38 = memref.load %arg3[%37, %c11] : memref<2x12xf32, #tpu.memory_space<smem>>
    %39 = vector.broadcast %22 : f32 to vector<8x128xf32>
    %40 = arith.subf %4, %39 : vector<8x128xf32>
    %41 = vector.broadcast %24 : f32 to vector<8x128xf32>
    %42 = arith.subf %6, %41 : vector<8x128xf32>
    %43 = vector.broadcast %26 : f32 to vector<8x128xf32>
    %44 = arith.subf %8, %43 : vector<8x128xf32>
    %45 = vector.broadcast %16 : f32 to vector<8x128xf32>
    %46 = arith.mulf %45, %40 : vector<8x128xf32>
    %47 = vector.broadcast %18 : f32 to vector<8x128xf32>
    %48 = arith.mulf %47, %42 : vector<8x128xf32>
    %49 = arith.addf %46, %48 : vector<8x128xf32>
    %50 = vector.broadcast %20 : f32 to vector<8x128xf32>
    %51 = arith.mulf %50, %44 : vector<8x128xf32>
    %52 = arith.addf %49, %51 : vector<8x128xf32>
    %53 = vector.broadcast %16 : f32 to vector<8x128xf32>
    %54 = arith.mulf %53, %52 : vector<8x128xf32>
    %55 = arith.subf %54, %40 : vector<8x128xf32>
    %56 = arith.subf %10, %55 : vector<8x128xf32>
    %57 = math.absf %56 : vector<8x128xf32>
    %58 = arith.mulf %56, %56 : vector<8x128xf32>
    %cst = arith.constant 1.000000e+00 : f32
    %59 = vector.broadcast %cst : f32 to vector<8x128xf32>
    %60 = arith.mulf %58, %59 : vector<8x128xf32>
    %cst_25 = arith.constant 5.000000e-01 : f32
    %61 = vector.broadcast %cst_25 : f32 to vector<8x128xf32>
    %62 = arith.cmpf olt, %57, %61 : vector<8x128xf32>
    %cst_26 = arith.constant 2.500000e-01 : f32
    %63 = vector.broadcast %cst_26 : f32 to vector<8x128xf32>
    %64 = arith.subf %57, %63 : vector<8x128xf32>
    %65 = arith.select %62, %60, %64 : vector<8x128xi1>, vector<8x128xf32>
    %66 = vector.broadcast %18 : f32 to vector<8x128xf32>
    %67 = arith.mulf %66, %52 : vector<8x128xf32>
    %68 = arith.subf %67, %42 : vector<8x128xf32>
    %69 = arith.subf %12, %68 : vector<8x128xf32>
    %70 = math.absf %69 : vector<8x128xf32>
    %71 = arith.mulf %69, %69 : vector<8x128xf32>
    %cst_27 = arith.constant 1.000000e+00 : f32
    %72 = vector.broadcast %cst_27 : f32 to vector<8x128xf32>
    %73 = arith.mulf %71, %72 : vector<8x128xf32>
    %cst_28 = arith.constant 5.000000e-01 : f32
    %74 = vector.broadcast %cst_28 : f32 to vector<8x128xf32>
    %75 = arith.cmpf olt, %70, %74 : vector<8x128xf32>
    %cst_29 = arith.constant 2.500000e-01 : f32
    %76 = vector.broadcast %cst_29 : f32 to vector<8x128xf32>
    %77 = arith.subf %70, %76 : vector<8x128xf32>
    %78 = arith.select %75, %73, %77 : vector<8x128xi1>, vector<8x128xf32>
    %79 = arith.addf %65, %78 : vector<8x128xf32>
    %80 = vector.broadcast %20 : f32 to vector<8x128xf32>
    %81 = arith.mulf %80, %52 : vector<8x128xf32>
    %82 = arith.subf %81, %44 : vector<8x128xf32>
    %83 = arith.subf %14, %82 : vector<8x128xf32>
    %84 = math.absf %83 : vector<8x128xf32>
    %85 = arith.mulf %83, %83 : vector<8x128xf32>
    %cst_30 = arith.constant 1.000000e+00 : f32
    %86 = vector.broadcast %cst_30 : f32 to vector<8x128xf32>
    %87 = arith.mulf %85, %86 : vector<8x128xf32>
    %cst_31 = arith.constant 5.000000e-01 : f32
    %88 = vector.broadcast %cst_31 : f32 to vector<8x128xf32>
    %89 = arith.cmpf olt, %84, %88 : vector<8x128xf32>
    %cst_32 = arith.constant 2.500000e-01 : f32
    %90 = vector.broadcast %cst_32 : f32 to vector<8x128xf32>
    %91 = arith.subf %84, %90 : vector<8x128xf32>
    %92 = arith.select %89, %87, %91 : vector<8x128xi1>, vector<8x128xf32>
    %93 = arith.addf %79, %92 : vector<8x128xf32>
    %94 = vector.broadcast %34 : f32 to vector<8x128xf32>
    %95 = arith.subf %4, %94 : vector<8x128xf32>
    %96 = vector.broadcast %36 : f32 to vector<8x128xf32>
    %97 = arith.subf %6, %96 : vector<8x128xf32>
    %98 = vector.broadcast %38 : f32 to vector<8x128xf32>
    %99 = arith.subf %8, %98 : vector<8x128xf32>
    %100 = vector.broadcast %28 : f32 to vector<8x128xf32>
    %101 = arith.mulf %100, %95 : vector<8x128xf32>
    %102 = vector.broadcast %30 : f32 to vector<8x128xf32>
    %103 = arith.mulf %102, %97 : vector<8x128xf32>
    %104 = arith.addf %101, %103 : vector<8x128xf32>
    %105 = vector.broadcast %32 : f32 to vector<8x128xf32>
    %106 = arith.mulf %105, %99 : vector<8x128xf32>
    %107 = arith.addf %104, %106 : vector<8x128xf32>
    %108 = vector.broadcast %28 : f32 to vector<8x128xf32>
    %109 = arith.mulf %108, %107 : vector<8x128xf32>
    %110 = arith.subf %109, %95 : vector<8x128xf32>
    %111 = arith.subf %110, %10 : vector<8x128xf32>
    %112 = math.absf %111 : vector<8x128xf32>
    %113 = arith.mulf %111, %111 : vector<8x128xf32>
    %cst_33 = arith.constant 1.000000e+00 : f32
    %114 = vector.broadcast %cst_33 : f32 to vector<8x128xf32>
    %115 = arith.mulf %113, %114 : vector<8x128xf32>
    %cst_34 = arith.constant 5.000000e-01 : f32
    %116 = vector.broadcast %cst_34 : f32 to vector<8x128xf32>
    %117 = arith.cmpf olt, %112, %116 : vector<8x128xf32>
    %cst_35 = arith.constant 2.500000e-01 : f32
    %118 = vector.broadcast %cst_35 : f32 to vector<8x128xf32>
    %119 = arith.subf %112, %118 : vector<8x128xf32>
    %120 = arith.select %117, %115, %119 : vector<8x128xi1>, vector<8x128xf32>
    %121 = vector.broadcast %30 : f32 to vector<8x128xf32>
    %122 = arith.mulf %121, %107 : vector<8x128xf32>
    %123 = arith.subf %122, %97 : vector<8x128xf32>
    %124 = arith.subf %123, %12 : vector<8x128xf32>
    %125 = math.absf %124 : vector<8x128xf32>
    %126 = arith.mulf %124, %124 : vector<8x128xf32>
    %cst_36 = arith.constant 1.000000e+00 : f32
    %127 = vector.broadcast %cst_36 : f32 to vector<8x128xf32>
    %128 = arith.mulf %126, %127 : vector<8x128xf32>
    %cst_37 = arith.constant 5.000000e-01 : f32
    %129 = vector.broadcast %cst_37 : f32 to vector<8x128xf32>
    %130 = arith.cmpf olt, %125, %129 : vector<8x128xf32>
    %cst_38 = arith.constant 2.500000e-01 : f32
    %131 = vector.broadcast %cst_38 : f32 to vector<8x128xf32>
    %132 = arith.subf %125, %131 : vector<8x128xf32>
    %133 = arith.select %130, %128, %132 : vector<8x128xi1>, vector<8x128xf32>
    %134 = arith.addf %120, %133 : vector<8x128xf32>
    %135 = vector.broadcast %32 : f32 to vector<8x128xf32>
    %136 = arith.mulf %135, %107 : vector<8x128xf32>
    %137 = arith.subf %136, %99 : vector<8x128xf32>
    %138 = arith.subf %137, %14 : vector<8x128xf32>
    %139 = math.absf %138 : vector<8x128xf32>
    %140 = arith.mulf %138, %138 : vector<8x128xf32>
    %cst_39 = arith.constant 1.000000e+00 : f32
    %141 = vector.broadcast %cst_39 : f32 to vector<8x128xf32>
    %142 = arith.mulf %140, %141 : vector<8x128xf32>
    %cst_40 = arith.constant 5.000000e-01 : f32
    %143 = vector.broadcast %cst_40 : f32 to vector<8x128xf32>
    %144 = arith.cmpf olt, %139, %143 : vector<8x128xf32>
    %cst_41 = arith.constant 2.500000e-01 : f32
    %145 = vector.broadcast %cst_41 : f32 to vector<8x128xf32>
    %146 = arith.subf %139, %145 : vector<8x128xf32>
    %147 = arith.select %144, %142, %146 : vector<8x128xi1>, vector<8x128xf32>
    %148 = arith.addf %134, %147 : vector<8x128xf32>
    %c0_i32_42 = arith.constant 0 : i32
    %149 = arith.cmpi eq, %arg1, %c0_i32_42 : i32
    %c0_i32_43 = arith.constant 0 : i32
    %150 = arith.cmpi eq, %arg2, %c0_i32_43 : i32
    %151 = arith.andi %149, %150 : i1
    %152 = arith.extui %151 : i1 to i32
    %c0_i32_44 = arith.constant 0 : i32
    %153 = arith.cmpi ne, %152, %c0_i32_44 : i32
    scf.if %153 {
      %160 = tpu.iota {dimensions = array<i32: 0>} : vector<8x128xi32>
      %161 = tpu.iota {dimensions = array<i32: 1>} : vector<8x128xi32>
      %c0_i32_48 = arith.constant 0 : i32
      %162 = vector.broadcast %c0_i32_48 : i32 to vector<8x128xi32>
      %163 = arith.addi %160, %162 : vector<8x128xi32>
      %c128_i32 = arith.constant 128 : i32
      %164 = vector.broadcast %c128_i32 : i32 to vector<8x128xi32>
      %165 = arith.muli %163, %164 : vector<8x128xi32>
      %166 = arith.addi %165, %161 : vector<8x128xi32>
      %c1000_i32 = arith.constant 1000 : i32
      %167 = vector.broadcast %c1000_i32 : i32 to vector<8x128xi32>
      %168 = arith.cmpi slt, %166, %167 : vector<8x128xi32>
      %169 = arith.extui %168 : vector<8x128xi1> to vector<8x128xi32>
      %170 = arith.sitofp %169 : vector<8x128xi32> to vector<8x128xf32>
      %171 = arith.mulf %93, %170 : vector<8x128xf32>
      %172 = arith.mulf %148, %170 : vector<8x128xf32>
      %c0_49 = arith.constant 0 : index
      %c0_50 = arith.constant 0 : index
      %c0_51 = arith.constant 0 : index
      %173 = vector.load %arg6[%c0_49, %c0_50, %c0_51] : memref<2x8x128xf32, #tpu.memory_space<vmem>>, vector<1x8x128xf32>
      %174 = vector.shape_cast %173 : vector<1x8x128xf32> to vector<8x128xf32>
      %175 = vector.shape_cast %171 : vector<8x128xf32> to vector<1x8x128xf32>
      %cst_52 = arith.constant dense<0.000000e+00> : vector<8x128xf32>
      %176 = vector.multi_reduction <add>, %175, %cst_52 [0] : vector<1x8x128xf32> to vector<8x128xf32>
      %177 = arith.addf %174, %176 : vector<8x128xf32>
      %c0_53 = arith.constant 0 : index
      %c0_54 = arith.constant 0 : index
      %c0_55 = arith.constant 0 : index
      %178 = vector.load %arg6[%c0_53, %c0_54, %c0_55] : memref<2x8x128xf32, #tpu.memory_space<vmem>>, vector<1x8x128xf32>
      %179 = vector.shape_cast %178 : vector<1x8x128xf32> to vector<8x128xf32>
      %180 = vector.shape_cast %177 : vector<8x128xf32> to vector<1x8x128xf32>
      tpu.vector_store %arg6[%c0_53, %c0_54, %c0_55], %180 {strides = array<i32>} : memref<2x8x128xf32, #tpu.memory_space<vmem>>, vector<1x8x128xf32>,
      %c1_56 = arith.constant 1 : index
      %c0_57 = arith.constant 0 : index
      %c0_58 = arith.constant 0 : index
      %181 = vector.load %arg6[%c1_56, %c0_57, %c0_58] : memref<2x8x128xf32, #tpu.memory_space<vmem>>, vector<1x8x128xf32>
      %182 = vector.shape_cast %181 : vector<1x8x128xf32> to vector<8x128xf32>
      %183 = vector.shape_cast %172 : vector<8x128xf32> to vector<1x8x128xf32>
      %cst_59 = arith.constant dense<0.000000e+00> : vector<8x128xf32>
      %184 = vector.multi_reduction <add>, %183, %cst_59 [0] : vector<1x8x128xf32> to vector<8x128xf32>
      %185 = arith.addf %182, %184 : vector<8x128xf32>
      %c1_60 = arith.constant 1 : index
      %c0_61 = arith.constant 0 : index
      %c0_62 = arith.constant 0 : index
      %186 = vector.load %arg6[%c1_60, %c0_61, %c0_62] : memref<2x8x128xf32, #tpu.memory_space<vmem>>, vector<1x8x128xf32>
      %187 = vector.shape_cast %186 : vector<1x8x128xf32> to vector<8x128xf32>
      %188 = vector.shape_cast %185 : vector<8x128xf32> to vector<1x8x128xf32>
      tpu.vector_store %arg6[%c1_60, %c0_61, %c0_62], %188 {strides = array<i32>} : memref<2x8x128xf32, #tpu.memory_space<vmem>>, vector<1x8x128xf32>,
    } else {
    }
    %true = arith.constant true
    %154 = arith.xori %151, %true : i1
    %155 = arith.extui %154 : i1 to i32
    %c0_i32_45 = arith.constant 0 : i32
    %156 = arith.cmpi ne, %155, %c0_i32_45 : i32
    scf.if %156 {
      %c0_48 = arith.constant 0 : index
      %c0_49 = arith.constant 0 : index
      %c0_50 = arith.constant 0 : index
      %160 = vector.load %arg6[%c0_48, %c0_49, %c0_50] : memref<2x8x128xf32, #tpu.memory_space<vmem>>, vector<1x8x128xf32>
      %161 = vector.shape_cast %160 : vector<1x8x128xf32> to vector<8x128xf32>
      %162 = vector.shape_cast %93 : vector<8x128xf32> to vector<1x8x128xf32>
      %cst_51 = arith.constant dense<0.000000e+00> : vector<8x128xf32>
      %163 = vector.multi_reduction <add>, %162, %cst_51 [0] : vector<1x8x128xf32> to vector<8x128xf32>
      %164 = arith.addf %161, %163 : vector<8x128xf32>
      %c0_52 = arith.constant 0 : index
      %c0_53 = arith.constant 0 : index
      %c0_54 = arith.constant 0 : index
      %165 = vector.load %arg6[%c0_52, %c0_53, %c0_54] : memref<2x8x128xf32, #tpu.memory_space<vmem>>, vector<1x8x128xf32>
      %166 = vector.shape_cast %165 : vector<1x8x128xf32> to vector<8x128xf32>
      %167 = vector.shape_cast %164 : vector<8x128xf32> to vector<1x8x128xf32>
      tpu.vector_store %arg6[%c0_52, %c0_53, %c0_54], %167 {strides = array<i32>} : memref<2x8x128xf32, #tpu.memory_space<vmem>>, vector<1x8x128xf32>,
      %c1_55 = arith.constant 1 : index
      %c0_56 = arith.constant 0 : index
      %c0_57 = arith.constant 0 : index
      %168 = vector.load %arg6[%c1_55, %c0_56, %c0_57] : memref<2x8x128xf32, #tpu.memory_space<vmem>>, vector<1x8x128xf32>
      %169 = vector.shape_cast %168 : vector<1x8x128xf32> to vector<8x128xf32>
      %170 = vector.shape_cast %148 : vector<8x128xf32> to vector<1x8x128xf32>
      %cst_58 = arith.constant dense<0.000000e+00> : vector<8x128xf32>
      %171 = vector.multi_reduction <add>, %170, %cst_58 [0] : vector<1x8x128xf32> to vector<8x128xf32>
      %172 = arith.addf %169, %171 : vector<8x128xf32>
      %c1_59 = arith.constant 1 : index
      %c0_60 = arith.constant 0 : index
      %c0_61 = arith.constant 0 : index
      %173 = vector.load %arg6[%c1_59, %c0_60, %c0_61] : memref<2x8x128xf32, #tpu.memory_space<vmem>>, vector<1x8x128xf32>
      %174 = vector.shape_cast %173 : vector<1x8x128xf32> to vector<8x128xf32>
      %175 = vector.shape_cast %172 : vector<8x128xf32> to vector<1x8x128xf32>
      tpu.vector_store %arg6[%c1_59, %c0_60, %c0_61], %175 {strides = array<i32>} : memref<2x8x128xf32, #tpu.memory_space<vmem>>, vector<1x8x128xf32>,
    } else {
    }
    %c0_i32_46 = arith.constant 0 : i32
    %157 = arith.cmpi eq, %arg2, %c0_i32_46 : i32
    %158 = arith.extui %157 : i1 to i32
    %c0_i32_47 = arith.constant 0 : i32
    %159 = arith.cmpi ne, %158, %c0_i32_47 : i32
    scf.if %159 {
      %c0_48 = arith.constant 0 : index
      %c0_49 = arith.constant 0 : index
      %c0_50 = arith.constant 0 : index
      %160 = vector.load %arg6[%c0_48, %c0_49, %c0_50] : memref<2x8x128xf32, #tpu.memory_space<vmem>>, vector<2x8x128xf32>
      %c0_51 = arith.constant 0 : index
      %c0_52 = arith.constant 0 : index
      %c0_53 = arith.constant 0 : index
      %c0_54 = arith.constant 0 : index
      %161 = vector.load %arg5[%c0_51, %c0_52, %c0_53, %c0_54] : memref<1x2x8x128xf32, #tpu.memory_space<vmem>>, vector<1x2x8x128xf32>
      %162 = vector.shape_cast %161 : vector<1x2x8x128xf32> to vector<2x8x128xf32>
      %163 = vector.shape_cast %160 : vector<2x8x128xf32> to vector<1x2x8x128xf32>
      tpu.vector_store %arg5[%c0_51, %c0_52, %c0_53, %c0_54], %163 {strides = array<i32>} : memref<1x2x8x128xf32, #tpu.memory_space<vmem>>, vector<1x2x8x128xf32>,
    } else {
    }
    return
  }
  func.func @transform_0(%arg0: i32, %arg1: i32, %arg2: i32, %arg3: memref<2x12xf32, #tpu.memory_space<smem>>) -> (i32, i32, i32, i32) {
    %c1_i32 = arith.constant 1 : i32
    %0 = arith.muli %arg1, %c1_i32 : i32
    %1 = arith.addi %0, %arg2 : i32
    %c0_i32 = arith.constant 0 : i32
    %c0_i32_0 = arith.constant 0 : i32
    %c0_i32_1 = arith.constant 0 : i32
    return %arg0, %c0_i32, %1, %c0_i32_0 : i32, i32, i32, i32
  }
  func.func @transform_1(%arg0: i32, %arg1: i32, %arg2: i32, %arg3: memref<2x12xf32, #tpu.memory_space<smem>>) -> (i32, i32, i32, i32) {
    %c1_i32 = arith.constant 1 : i32
    %0 = arith.muli %arg0, %c1_i32 : i32
    %1 = arith.addi %0, %arg1 : i32
    %c0_i32 = arith.constant 0 : i32
    %c0_i32_0 = arith.constant 0 : i32
    %c0_i32_1 = arith.constant 0 : i32
    %c0_i32_2 = arith.constant 0 : i32
    return %1, %c0_i32, %c0_i32_0, %c0_i32_1 : i32, i32, i32, i32
  }
}

</mosaic_0001>

<llo_original>
// kernel: vote_line_losses.1
$region0: #{vote_line_losses.1}
  #allocation0 [shape = 'u32[]', space=smem, size = 0x4, offset = 0x4, fixed_abs, tag = 'smem constant byte address 0x4 - core index']
  #allocation1 [shape = 'u32[144,128]{1,0:T(1,128)}', space=vmem, size = 0x12000, scoped, tag = 'internal scratch']
  #allocation2 [shape = 'f32[2,8,128]{2,1,0:T(8,128)}', space=vmem, size = 0x2000, scoped, tag = 'scratch operand']
  #allocation3 [shape = 's32[1]{0}', space=sflag, size = 0x4, scoped, tag = 'scoped memory for vote_line_losses.1']
  #allocation4 [shape = 'u8[1024]{0}', space=smem, size = 0x400, scoped, tag = 'prefetched SMEM operand 0']
  %s0 = inlined_call_operand.vmem [shape: f32[2,12], index: 0, kind: input, shape index: {}]
  %s1 = inlined_call_operand.vmem [shape: f32[2,6,8,128], index: 1, kind: input, shape index: {}]
  %s2 = inlined_call_operand.vmem [shape: f32[2,2,8,128], index: 2, kind: output, shape index: {}]
  %s3 = sld [smem:[#allocation0]]
  $region53: #{vote_line_losses.1} parent=0
    _
  %s5 = ssub.s32 1, %s3
  %s6 = scalar_select 0, %s5, %s3
  %s7 = sshll.u32 %s0, 4
  %s8 = int_to_ptr.vmem [resolvable:$true] %s7
  %10 = dma.vmem_to_smem %s8, 32, [#allocation4], [#allocation3]
  %11 = dma.done [#allocation3], 32
  %12 = sfence
  loop: start=0, step=1, limit=4
  $region2: #{vote_line_losses.1} parent=0 // loop_pre_header
    _
  $region3: #{vote_line_losses.1} parent=0 // loop_header
    %s14 = sphi 0, %s18
    %p15 = scmp.ge.s32.totalorder %s14, 4
    %s21 = sphi 0, %s40
    %s22 = sphi 0, %s36
    %s23 = sphi 0, %s32
    %s24 = sphi 0, %s21
    %s25 = sphi 0, %s22
    %s26 = sphi 0, %s23
    %s27 = sphi 0, %s24
    %s28 = sphi 0, %s25
    %s29 = sphi 0, %s26
    %s47 = sphi 0, %s49
    %s50 = sphi 0, %s47
    %s51 = sphi 0, %s50
    %s67 = sphi 0, %s51
    %s75 = sphi 0, %s77
    %s78 = sphi 0, %s75
    %s79 = sphi 0, %s78
    %s95 = sphi 0, %s79
  $region4: #{vote_line_losses.1} parent=0 // loop_header_branch
    %17 = sbr.rel (%p15) target = $region8
  $region5: #{vote_line_losses.1} parent=0 // loop_body
    %s19 = ssub.s32 %s14, 1
    %s20 = ssub.s32 %s14, 2
    %s30 = sadd.s32 1, %s23
    %p31 = scmp.ge.s32.totalorder %s30, 1
    %s32 = scalar_select %p31, 0, %s30
    %s33 = sadd.s32 1, %s22
    %s34 = scalar_select %p31, %s33, %s22
    %p35 = scmp.ge.s32.totalorder %s34, 1
    %s36 = scalar_select %p35, 0, %s34
    %s37 = sadd.s32 1, %s21
    %s38 = scalar_select %p35, %s37, %s21
    %p39 = scmp.ge.s32.totalorder %s38, 2
    %s40 = scalar_select %p39, 0, %s38
    %s41 = sadd.s32 %s22, %s23
    %s42 = sadd.s32 %s36, %s32
    %s43 = ssub.s32 %s21, %s40
    %s44 = ssub.s32 %s41, %s42
    %s45 = sor.u32 %s43, %s44
    %p46 = scmp.eq.s32.totalorder %s45, 0
    %s48 = sadd.s32 %s47, 1
    %s49 = scalar_select %p46, %s47, %s48
    %p52 = pneg %p46
    %p53 = scmp.eq.s32.totalorder %s14, 1
    %p54 = por %p52, %p53
    %p55 = scmp.ne.s32.totalorder %s47, %s50
    %p56 = scmp.eq.s32.totalorder %s14, 0
    %p57 = por %p55, %p56
    %p58 = scmp.ne.s32.totalorder %s47, %s50
    %p59 = scmp.eq.s32.totalorder %s19, 1
    %p60 = por %p58, %p59
    %p61 = scmp.ne.s32.totalorder %s50, %s51
    %p62 = scmp.eq.s32.totalorder %s19, 0
    %p63 = por %p61, %p62
    %p64 = scmp.ne.s32.totalorder %s50, %s51
    %p65 = scmp.eq.s32.totalorder %s20, 1
    %p66 = por %p64, %p65
    %p68 = scmp.ne.s32.totalorder %s51, %s67
    %p69 = scmp.eq.s32.totalorder %s20, 0
    %p70 = por %p68, %p69
    %s71 = sadd.s32 %s21, %s22
    %s72 = sadd.s32 %s40, %s36
    %s73 = ssub.s32 %s71, %s72
    %p74 = scmp.eq.s32.totalorder %s73, 0
    %s76 = sadd.s32 %s75, 1
    %s77 = scalar_select %p74, %s75, %s76
    %p80 = pneg %p74
    %p81 = scmp.eq.s32.totalorder %s14, 1
    %p82 = por %p80, %p81
    %p83 = scmp.ne.s32.totalorder %s75, %s78
    %p84 = scmp.eq.s32.totalorder %s14, 0
    %p85 = por %p83, %p84
    %p86 = scmp.ne.s32.totalorder %s75, %s78
    %p87 = scmp.eq.s32.totalorder %s19, 1
    %p88 = por %p86, %p87
    %p89 = scmp.ne.s32.totalorder %s78, %s79
    %p90 = scmp.eq.s32.totalorder %s19, 0
    %p91 = por %p89, %p90
    %p92 = scmp.ne.s32.totalorder %s78, %s79
    %p93 = scmp.eq.s32.totalorder %s20, 1
    %p94 = por %p92, %p93
    %p96 = scmp.ne.s32.totalorder %s79, %s95
    %p97 = scmp.eq.s32.totalorder %s20, 0
    %p98 = por %p96, %p97
    %p99 = scmp.le.s32.totalorder 1, %s14
    %p100 = scmp.lt.s32.totalorder %s14, 3
    %p101 = pnand %p99, %p100
    %p102 = pneg %p101
    // Predicated region
    $region9: #{vote_line_losses.1} parent=5 // pred_check
      _
    $region10: #{vote_line_losses.1} parent=5 // pred_check_branch
      %104 = sbr.rel (%p101) target = $region12
    $region11: #{vote_line_losses.1} parent=5 // pred_region
      %s105 = ssub.s32 %s14, 1
    $region12: #{vote_line_losses.1} parent=5 // pred_fallthru
      _
    %p106 = scmp.lt.s32.totalorder %s14, 2
    // Predicated region
    $region13: #{vote_line_losses.1} parent=5 // pred_check
      %p107 = pneg %p106
    $region14: #{vote_line_losses.1} parent=5 // pred_check_branch
      %109 = sbr.rel (%p107) target = $region16
    $region15: #{vote_line_losses.1} parent=5 // pred_region
      // Predicated region
      $region17: #{vote_line_losses.1} parent=15 // pred_check
        %p110 = pneg %p57
      $region18: #{vote_line_losses.1} parent=15 // pred_check_branch
        %112 = sbr.rel (%p110) target = $region20
      $region19: #{vote_line_losses.1} parent=15 // pred_region
        %s113 = sadd.s32 %s22, %s23
        %p114 = scmp.lt.s32.totalorder %s21, 1
        %s115 = scalar_select %p114, %s21, 1
        %p116 = scmp.lt.s32.totalorder %s113, 0
        %s117 = scalar_select %p116, %s113, 0
        %s118 = smul.addr %s115, 6
        %s119 = sadd.s32 %s117, %s118
        %s120 = smul.addr %s119, 8
        %s121 = scalar_lea.vmem %s1, %s120
        %s122 = sadd.s32 %s22, %s23
      $region20: #{vote_line_losses.1} parent=15 // pred_fallthru
        _
    $region16: #{vote_line_losses.1} parent=5 // pred_fallthru
      _
    %p123 = scmp.le.s32.totalorder 1, %s14
    %p124 = scmp.lt.s32.totalorder %s14, 3
    %p125 = pnand %p123, %p124
    %p126 = pneg %p125
    // Predicated region
    $region21: #{vote_line_losses.1} parent=5 // pred_check
      _
    $region22: #{vote_line_losses.1} parent=5 // pred_check_branch
      %128 = sbr.rel (%p125) target = $region24
    $region23: #{vote_line_losses.1} parent=5 // pred_region
      %s129 = ssub.s32 %s14, 1
      %s130 = sadd.s32 %s25, %s26
      %p131 = scmp.lt.s32.totalorder %s24, 1
      %s132 = scalar_select %p131, %s24, 1
      %p133 = scmp.lt.s32.totalorder %s130, 0
      %s134 = scalar_select %p133, %s130, 0
      %s135 = smul.addr %s132, 6
      %s136 = sadd.s32 %s134, %s135
      %s137 = smul.addr %s136, 8
      %s138 = scalar_lea.vmem %s1, %s137
      %p139 = pneg %p63
      %p140 = pneg %p60
      %p141 = pneg %p91
      %p142 = pneg %p88
      %s143 = sadd.s32 %s24, %s25
      %p144 = scmp.lt.s32.totalorder %s143, 1
      %s145 = scalar_select %p144, %s143, 1
      %s146 = smul.addr %s145, 2
      %s147 = smul.addr %s146, 8
      %s148 = scalar_lea.vmem %s2, %s147
      %s149 = sadd.s32 %s25, %s26
      %p150 = scmp.lt.s32.totalorder %s24, 1
      %s151 = scalar_select %p150, %s24, 1
      %p152 = scmp.lt.s32.totalorder %s149, 0
      %s153 = scalar_select %p152, %s149, 0
      %s154 = smul.addr %s151, 6
      %s155 = sadd.s32 %s153, %s154
      %s156 = smul.addr %s155, 8
      %s157 = scalar_lea.vmem %s1, %s156
      %s158 = sadd.s32 %s25, %s26
      %s159 = sadd.s32 %s24, %s25
      %p160 = scmp.lt.s32.totalorder %s159, 1
      %s161 = scalar_select %p160, %s159, 1
      %s162 = smul.addr %s161, 2
      %s163 = smul.addr %s162, 8
      %s164 = scalar_lea.vmem %s2, %s163
      %s165 = sadd.s32 %s24, %s25
      %p166 = scmp.eq.s32.totalorder %s26, 0
      // Predicated region
      $region25: #{vote_line_losses.1} parent=23 // pred_check
        %p167 = pneg %p166
      $region26: #{vote_line_losses.1} parent=23 // pred_check_branch
        %169 = sbr.rel (%p167) target = $region28
      $region27: #{vote_line_losses.1} parent=23 // pred_region
        %170 = vst [vmem:[#allocation2] sm:$0xff] 0.0
        %171 = vst [vmem:[#allocation2 + $0x8] sm:$0xff] 0.0
      $region28: #{vote_line_losses.1} parent=23 // pred_fallthru
        _
      %v172 = vld [vmem:[%s157] sm:$0xff]
      %s173 = scalar_lea.vmem %s157, 8
      %v174 = vld [vmem:[%s173] sm:$0xff]
      %s175 = scalar_lea.vmem %s157, 16
      %v176 = vld [vmem:[%s175] sm:$0xff]
      %s177 = scalar_lea.vmem %s157, 24
      %v178 = vld [vmem:[%s177] sm:$0xff]
      %s179 = scalar_lea.vmem %s157, 32
      %v180 = vld [vmem:[%s179] sm:$0xff]
      %s181 = scalar_lea.vmem %s157, 40
      %v182 = vld [vmem:[%s181] sm:$0xff]
      %s183 = smul.u32 %s24, 128
      %s184 = sld [smem:[#allocation4 + %s183]]
      %s185 = sadd.s32 %s183, 1
      %s186 = sld [smem:[#allocation4 + %s185]]
      %s187 = sadd.s32 %s183, 2
      %s188 = sld [smem:[#allocation4 + %s187]]
      %s189 = sadd.s32 %s183, 3
      %s190 = sld [smem:[#allocation4 + %s189]]
      %s191 = sadd.s32 %s183, 4
      %s192 = sld [smem:[#allocation4 + %s191]]
      %s193 = sadd.s32 %s183, 5
      %s194 = sld [smem:[#allocation4 + %s193]]
      %s195 = sadd.s32 %s183, 6
      %s196 = sld [smem:[#allocation4 + %s195]]
      %s197 = sadd.s32 %s183, 7
      %s198 = sld [smem:[#allocation4 + %s197]]
      %s199 = sadd.s32 %s183, 8
      %s200 = sld [smem:[#allocation4 + %s199]]
      %s201 = sadd.s32 %s183, 9
      %s202 = sld [smem:[#allocation4 + %s201]]
      %s203 = sadd.s32 %s183, 10
      %s204 = sld [smem:[#allocation4 + %s203]]
      %s205 = sadd.s32 %s183, 11
      %s206 = sld [smem:[#allocation4 + %s205]]
      %v207 = vstv %s190
      %v208 = vsub.f32 %v172, %v207
      %v209 = vstv %s192
      %v210 = vsub.f32 %v174, %v209
      %v211 = vstv %s194
      %v212 = vsub.f32 %v176, %v211
      %v213 = vstv %s184
      %v214 = vmul.f32 %v213, %v208
      %v215 = vstv %s186
      %v216 = vmul.f32 %v215, %v210
      %v217 = vadd.f32 %v214, %v216
      %v218 = vstv %s188
      %v219 = vmul.f32 %v218, %v212
      %v220 = vadd.f32 %v217, %v219
      %v221 = vmul.f32 %v213, %v220
      %v222 = vsub.f32 %v221, %v208
      %v223 = vsub.f32 %v178, %v222
      %v224 = vand.u32 2147483647, %v223
      %v225 = vmul.f32 %v223, %v223
      %vm226 = vcmp.lt.f32.partialorder %v224, 0.5
      %v227 = vsub.f32 %v224, 0.25
      %v228 = vsel %vm226, %v225, %v227
      %v229 = vmul.f32 %v215, %v220
      %v230 = vsub.f32 %v229, %v210
      %v231 = vsub.f32 %v180, %v230
      %v232 = vand.u32 2147483647, %v231
      %v233 = vmul.f32 %v231, %v231
      %vm234 = vcmp.lt.f32.partialorder %v232, 0.5
      %v235 = vsub.f32 %v232, 0.25
      %v236 = vsel %vm234, %v233, %v235
      %v237 = vadd.f32 %v228, %v236
      %v238 = vmul.f32 %v218, %v220
      %v239 = vsub.f32 %v238, %v212
      %v240 = vsub.f32 %v182, %v239
      %v241 = vand.u32 2147483647, %v240
      %v242 = vmul.f32 %v240, %v240
      %vm243 = vcmp.lt.f32.partialorder %v241, 0.5
      %v244 = vsub.f32 %v241, 0.25
      %v245 = vsel %vm243, %v242, %v244
      %v246 = vadd.f32 %v237, %v245
      %v247 = vstv %s202
      %v248 = vsub.f32 %v172, %v247
      %v249 = vstv %s204
      %v250 = vsub.f32 %v174, %v249
      %v251 = vstv %s206
      %v252 = vsub.f32 %v176, %v251
      %v253 = vstv %s196
      %v254 = vmul.f32 %v253, %v248
      %v255 = vstv %s198
      %v256 = vmul.f32 %v255, %v250
      %v257 = vadd.f32 %v254, %v256
      %v258 = vstv %s200
      %v259 = vmul.f32 %v258, %v252
      %v260 = vadd.f32 %v257, %v259
      %v261 = vmul.f32 %v253, %v260
      %v262 = vsub.f32 %v261, %v248
      %v263 = vsub.f32 %v262, %v178
      %v264 = vand.u32 2147483647, %v263
      %v265 = vmul.f32 %v263, %v263
      %vm266 = vcmp.lt.f32.partialorder %v264, 0.5
      %v267 = vsub.f32 %v264, 0.25
      %v268 = vsel %vm266, %v265, %v267
      %v269 = vmul.f32 %v255, %v260
      %v270 = vsub.f32 %v269, %v250
      %v271 = vsub.f32 %v270, %v180
      %v272 = vand.u32 2147483647, %v271
      %v273 = vmul.f32 %v271, %v271
      %vm274 = vcmp.lt.f32.partialorder %v272, 0.5
      %v275 = vsub.f32 %v272, 0.25
      %v276 = vsel %vm274, %v273, %v275
      %v277 = vadd.f32 %v268, %v276
      %v278 = vmul.f32 %v258, %v260
      %v279 = vsub.f32 %v278, %v252
      %v280 = vsub.f32 %v279, %v182
      %v281 = vand.u32 2147483647, %v280
      %v282 = vmul.f32 %v280, %v280
      %vm283 = vcmp.lt.f32.partialorder %v281, 0.5
      %v284 = vsub.f32 %v281, 0.25
      %v285 = vsel %vm283, %v282, %v284
      %v286 = vadd.f32 %v277, %v285
      %p287 = scmp.eq.s32.totalorder %s25, 0
      %p288 = pnand %p287, %p166
      %p289 = pneg %p288
      // Predicated region
      $region29: #{vote_line_losses.1} parent=23 // pred_check
        _
      $region30: #{vote_line_losses.1} parent=23 // pred_check_branch
        %291 = sbr.rel (%p288) target = $region32
      $region31: #{vote_line_losses.1} parent=23 // pred_region
        %v292 = vlaneseq
        %v293 = vshrl.u32 %v292, 7
        %v294 = vlaneseq
        %v295 = vand.u32 %v294, 127
        %v296 = vmul.u32 %v293, 128
        %v297 = vadd.s32 %v296, %v295
        %vm298 = vcmp.lt.s32.totalorder %v297, 1000
        %v299 = vsel %vm298, 1, 0
        %v300 = vcvt.s32.f32 %v299
        %v301 = vmul.f32 %v246, %v300
        %v302 = vmul.f32 %v286, %v300
        %v303 = vld [vmem:[#allocation2] sm:$0xff]
        %v304 = vadd.f32 %v301, 0.0
        %v305 = vadd.f32 %v303, %v304
        %306 = vst [vmem:[#allocation2] sm:$0xff] %v305
        %s307 = scalar_lea.vmem [#allocation2], 8
        %v308 = vld [vmem:[%s307] sm:$0xff]
        %v309 = vadd.f32 %v302, 0.0
        %v310 = vadd.f32 %v308, %v309
        %311 = vst [vmem:[%s307] sm:$0xff] %v310
      $region32: #{vote_line_losses.1} parent=23 // pred_fallthru
        _
      %p312 = pneg %p289
      // Predicated region
      $region33: #{vote_line_losses.1} parent=23 // pred_check
        _
      $region34: #{vote_line_losses.1} parent=23 // pred_check_branch
        %314 = sbr.rel (%p289) target = $region36
      $region35: #{vote_line_losses.1} parent=23 // pred_region
        %v315 = vld [vmem:[#allocation2] sm:$0xff]
        %v316 = vadd.f32 %v246, 0.0
        %v317 = vadd.f32 %v315, %v316
        %318 = vst [vmem:[#allocation2] sm:$0xff] %v317
        %s319 = scalar_lea.vmem [#allocation2], 8
        %v320 = vld [vmem:[%s319] sm:$0xff]
        %v321 = vadd.f32 %v286, 0.0
        %v322 = vadd.f32 %v320, %v321
        %323 = vst [vmem:[%s319] sm:$0xff] %v322
      $region36: #{vote_line_losses.1} parent=23 // pred_fallthru
        _
      // Predicated region
      $region37: #{vote_line_losses.1} parent=23 // pred_check
        %p324 = pneg %p166
      $region38: #{vote_line_losses.1} parent=23 // pred_check_branch
        %326 = sbr.rel (%p324) target = $region40
      $region39: #{vote_line_losses.1} parent=23 // pred_region
        %v327 = vld [vmem:[#allocation2] sm:$0xff]
        %v328 = vld [vmem:[#allocation2 + $0x8] sm:$0xff]
        %329 = vst [vmem:[%s164] sm:$0xff] %v327
        %330 = vst [vmem:[%s164 + $0x8] sm:$0xff] %v328
      $region40: #{vote_line_losses.1} parent=23 // pred_fallthru
        _
      %s331 = sadd.s32 %s24, %s25
      %p332 = scmp.lt.s32.totalorder %s331, 1
      %s333 = scalar_select %p332, %s331, 1
      %s334 = smul.addr %s333, 2
      %s335 = smul.addr %s334, 8
      %s336 = scalar_lea.vmem %s2, %s335
      // Predicated region
      $region41: #{vote_line_losses.1} parent=23 // pred_check
        %p337 = pneg %p88
      $region42: #{vote_line_losses.1} parent=23 // pred_check_branch
        %339 = sbr.rel (%p337) target = $region44
      $region43: #{vote_line_losses.1} parent=23 // pred_region
        %s340 = sadd.s32 %s24, %s25
      $region44: #{vote_line_losses.1} parent=23 // pred_fallthru
        _
    $region24: #{vote_line_losses.1} parent=5 // pred_fallthru
      _
    %p341 = scmp.le.s32.totalorder 2, %s14
    // Predicated region
    $region45: #{vote_line_losses.1} parent=5 // pred_check
      %p342 = pneg %p341
    $region46: #{vote_line_losses.1} parent=5 // pred_check_branch
      %344 = sbr.rel (%p342) target = $region48
    $region47: #{vote_line_losses.1} parent=5 // pred_region
      %s345 = ssub.s32 %s14, 2
      // Predicated region
      $region49: #{vote_line_losses.1} parent=47 // pred_check
        %p346 = pneg %p94
      $region50: #{vote_line_losses.1} parent=47 // pred_check_branch
        %348 = sbr.rel (%p346) target = $region52
      $region51: #{vote_line_losses.1} parent=47 // pred_region
        %s349 = sadd.s32 %s27, %s28
        %p350 = scmp.lt.s32.totalorder %s349, 1
        %s351 = scalar_select %p350, %s349, 1
        %s352 = smul.addr %s351, 2
        %s353 = smul.addr %s352, 8
        %s354 = scalar_lea.vmem %s2, %s353
      $region52: #{vote_line_losses.1} parent=47 // pred_fallthru
        _
    $region48: #{vote_line_losses.1} parent=5 // pred_fallthru
      _
  $region6: #{vote_line_losses.1} parent=0 // loop_footer
    %s18 = sadd.s32 1, %s14
  $region7: #{vote_line_losses.1} parent=0 // loop_footer_branch
    %13 = sbr.rel target = $region3
  $region8: #{vote_line_losses.1} parent=0 // loop_exit
    _

</llo_original>
